<compile_context>
chip_gen: v7x
topology: tpu7x:2x2x1
jax: 0.10.0
libtpu: 0.0.40
codegen_flags: <defaults>
</compile_context>

<pallas_src>
import math

import jax
import jax.numpy as jnp
from jax.experimental import pallas as pl
from jax.experimental.pallas import tpu as pltpu


def encoder_kernel(x_ref, mask_ref, w_ref, pos_ref, trig_ref, out_ref):
    # Masked input. Multiply (not `where`) so soft / float masks keep PyTorch semantics;
    # the int8 {0,1} mask used in the demo converts exactly.
    xm = x_ref[...] * mask_ref[...].astype(jnp.float32)
    # MXU matmul in bf16 operands with f32 accumulation (f32 operands are emulated as
    # multiple bf16 passes on v5e/v6e/v7x and can make the vmatmul slot binding on v5e).
    w = w_ref[...]
    z = jnp.dot(xm.astype(w.dtype), w, preferred_element_type=jnp.float32)
    # Positional encoding: sin(pos*div + phase); phase is 0 on even cols, pi/2 on odd
    # cols so one EUP sin yields the interleaved sin/cos (error vs true cos ~1e-7).
    pe = jnp.sin(pos_ref[...] * trig_ref[0:1, :] + trig_ref[1:2, :])
    out_ref[...] = (z + pe).astype(out_ref.dtype)


def _round_up(x, m):
    return -(-x // m) * m


def encoder_forward(x, pos, mask, w_t, *, tm_max=512, dot_dtype=jnp.bfloat16):
    """x: [B,S,K], pos: [B,S], mask: [B,S,K] (any numeric dtype), w_t: [K,D] = W^T.

    tm_max: row-tile cap.  512 keeps >=2 grid steps for mid-size M (v7x megacore
    sharding) while the double-buffered working set stays ~3 MiB; on v6e/v5e it can
    be raised to 1024-2048 for very large M to amortize the ~0.35 us/step overhead.
    """
    B, S, K = x.shape
    Kd, D = w_t.shape
    assert Kd == K
    assert D % 2 == 0, "sinusoidal PE requires an even latent_dim"
    M = B * S

    # Tile selection: pick the number of row tiles first, then round the tile up to a
    # multiple of 32.  Either TM % 32 == 0 (legal sublane multiple, int8-friendly) or
    # TM == M (full-dim escape).  A partial last tile is handled by the cdiv grid, so
    # no padded HBM copies of x / mask are ever materialized.
    nt = pl.cdiv(M, tm_max)
    TM = min(_round_up(pl.cdiv(M, nt), 32), M)
    grid = (pl.cdiv(M, TM),)

    x_flat = x.reshape(M, K).astype(jnp.float32)     # contiguous reshape: no data pass
    mask_flat = mask.reshape(M, K)                   # passed through in caller's dtype
    pos_flat = pos.reshape(M, 1).astype(jnp.float32)
    w_pass = w_t.astype(dot_dtype)                   # tiny [K, D], stays VMEM-resident

    # trig[0, j] = div_term[j // 2] ; trig[1, j] = 0 (even j) / pi/2 (odd j)
    div_half = jnp.exp(jnp.arange(0, D, 2, dtype=jnp.float32)
                       * (-math.log(10000.0) / D))
    div_full = jnp.repeat(div_half, 2)
    phase = jnp.tile(jnp.array([0.0, 0.5 * math.pi], jnp.float32), D // 2)
    trig = jnp.stack([div_full, phase])              # [2, D]

    out_flat = pl.pallas_call(
        encoder_kernel,
        out_shape=jax.ShapeDtypeStruct((M, D), jnp.float32),
        grid=grid,
        in_specs=[
            pl.BlockSpec((TM, K), lambda i: (i, 0)),   # x tile (full K, no padding)
            pl.BlockSpec((TM, K), lambda i: (i, 0)),   # mask tile
            pl.BlockSpec((K, D), lambda i: (0, 0)),    # W^T (resident)
            pl.BlockSpec((TM, 1), lambda i: (i, 0)),   # pos tile
            pl.BlockSpec((2, D), lambda i: (0, 0)),    # div/phase (resident)
        ],
        out_specs=pl.BlockSpec((TM, D), lambda i: (i, 0)),
        compiler_params=pltpu.CompilerParams(
            dimension_semantics=("parallel",)),
    )(x_flat, mask_flat, w_pass, pos_flat, trig)

    return out_flat.reshape(B, S, D)


def encoder_reference(x, pos, mask, w_t):
    """Pure-JAX f32 reference mirroring the PyTorch module exactly."""
    D = w_t.shape[1]
    xm = x * mask.astype(x.dtype)
    z = jnp.einsum("bsk,kd->bsd", xm, w_t.astype(jnp.float32))
    div_half = jnp.exp(jnp.arange(0, D, 2, dtype=jnp.float32)
                       * (-math.log(10000.0) / D))
    angle = pos[..., None].astype(jnp.float32) * div_half[None, None, :]
    pe = jnp.zeros(z.shape, jnp.float32)
    pe = pe.at[..., 0::2].set(jnp.sin(angle))
    pe = pe.at[..., 1::2].set(jnp.cos(angle))
    return z + pe


if __name__ == "__main__":
    INPUT_DIM, LATENT_DIM = 383, 64
    key = jax.random.PRNGKey(0)
    kw = jax.random.fold_in(key, 0)

    # Deterministic Linear weight (PyTorch shape [D, K]); kernel consumes W^T [K, D].
    bound = 1.0 / math.sqrt(INPUT_DIM)
    w = jax.random.uniform(kw, (LATENT_DIM, INPUT_DIM), dtype=jnp.float32,
                           minval=-bound, maxval=bound)
    w_t = w.T

    def run_case(B, S, tm_max):
        ck = jax.random.fold_in(key, B * 1000 + S)
        kx, kp, km = jax.random.split(ck, 3)
        x = jax.random.normal(kx, (B, S, INPUT_DIM), dtype=jnp.float32)
        pos = jax.random.uniform(kp, (B, S), dtype=jnp.float32) * 100.0
        # Binary mask shipped as int8 (exact for {0,1}; soft float masks also supported).
        mask = (jax.random.uniform(km, (B, S, INPUT_DIM)) > 0.2).astype(jnp.int8)

        out = encoder_forward(x, pos, mask, w_t, tm_max=tm_max)
        jax.block_until_ready(out)

        ref = encoder_reference(x, pos, mask, w_t)
        assert out.shape == (B, S, LATENT_DIM)
        # bf16 matmul operands (f32 accumulation) vs the f32 reference: expected abs
        # error is a few 1e-3 at these magnitudes; 3e-2 tolerance is comfortably safe.
        assert jnp.allclose(out, ref, atol=3e-2, rtol=3e-2), (
            f"mismatch vs reference for B={B}, S={S}")

    # Case 1: small shape from the module spec (single full tile, grid=(1,)).
    run_case(B=2, S=8, tm_max=512)
    # Case 2: exercises a multi-step grid with a partial last row tile (M=69, TM=32).
    run_case(B=3, S=23, tm_max=32)

    print("KERNEL_OK")
</pallas_src>

<mosaic_0001>
module attributes {stable_mosaic.version = 11 : i64} {
  func.func @encoder_kernel(%arg0: i32, %arg1: memref<16x383xf32, #tpu.memory_space<vmem>>, %arg2: memref<16x383xi8, #tpu.memory_space<vmem>>, %arg3: memref<383x64xbf16, #tpu.memory_space<vmem>>, %arg4: memref<16x1xf32, #tpu.memory_space<vmem>>, %arg5: memref<2x64xf32, #tpu.memory_space<vmem>>, %arg6: memref<16x64xf32, #tpu.memory_space<vmem>>) attributes {dimension_semantics = [#tpu.dimension_semantics<parallel>], iteration_bounds = array<i64: 1>, scalar_prefetch = 0 : i64, scratch_operands = 0 : i64, tpu.core_type = #tpu.core_type<tc>, window_params = [{transform_indices = @transform_0, window_bounds = array<i64: 16, 383>}, {transform_indices = @transform_1, window_bounds = array<i64: 16, 383>}, {pipeline_mode = #tpu.pipeline_mode<synchronous>, transform_indices = @transform_2, window_bounds = array<i64: 383, 64>}, {transform_indices = @transform_3, window_bounds = array<i64: 16, 1>}, {pipeline_mode = #tpu.pipeline_mode<synchronous>, transform_indices = @transform_4, window_bounds = array<i64: 2, 64>}, {transform_indices = @transform_5, window_bounds = array<i64: 16, 64>}]} {
    %c0 = arith.constant 0 : index
    %c0_0 = arith.constant 0 : index
    %0 = vector.load %arg1[%c0, %c0_0] : memref<16x383xf32, #tpu.memory_space<vmem>>, vector<16x383xf32>
    %c0_1 = arith.constant 0 : index
    %c0_2 = arith.constant 0 : index
    %1 = vector.load %arg2[%c0_1, %c0_2] : memref<16x383xi8, #tpu.memory_space<vmem>>, vector<16x383xi8>
    %2 = arith.sitofp %1 : vector<16x383xi8> to vector<16x383xf32>
    %3 = arith.mulf %0, %2 : vector<16x383xf32>
    %c0_3 = arith.constant 0 : index
    %c0_4 = arith.constant 0 : index
    %4 = vector.load %arg3[%c0_3, %c0_4] : memref<383x64xbf16, #tpu.memory_space<vmem>>, vector<383x64xbf16>
    %5 = arith.truncf %3 : vector<16x383xf32> to vector<16x383xbf16>
    %cst = arith.constant dense<0.000000e+00> : vector<16x64xf32>
    %6 = tpu.matmul %5, %4, %cst {dimension_numbers = #tpu.dot_dimension_numbers<[1], [0], [0], [1], [0, 0, 1, 1], [], []>} : vector<16x383xbf16>, vector<383x64xbf16>, vector<16x64xf32> -> vector<16x64xf32>
    %c0_5 = arith.constant 0 : index
    %c0_6 = arith.constant 0 : index
    %7 = vector.load %arg4[%c0_5, %c0_6] : memref<16x1xf32, #tpu.memory_space<vmem>>, vector<16x1xf32>
    %c0_7 = arith.constant 0 : index
    %c0_8 = arith.constant 0 : index
    %8 = vector.load %arg5[%c0_7, %c0_8] : memref<2x64xf32, #tpu.memory_space<vmem>>, vector<1x64xf32>
    %9 = vector.broadcast %7 : vector<16x1xf32> to vector<16x64xf32>
    %10 = vector.broadcast %8 : vector<1x64xf32> to vector<16x64xf32>
    %11 = arith.mulf %9, %10 : vector<16x64xf32>
    %c1 = arith.constant 1 : index
    %c0_9 = arith.constant 0 : index
    %12 = vector.load %arg5[%c1, %c0_9] : memref<2x64xf32, #tpu.memory_space<vmem>>, vector<1x64xf32>
    %13 = vector.broadcast %12 : vector<1x64xf32> to vector<16x64xf32>
    %14 = arith.addf %11, %13 : vector<16x64xf32>
    %15 = math.sin %14 : vector<16x64xf32>
    %16 = arith.addf %6, %15 : vector<16x64xf32>
    %c0_10 = arith.constant 0 : index
    %c0_11 = arith.constant 0 : index
    %17 = vector.load %arg6[%c0_10, %c0_11] : memref<16x64xf32, #tpu.memory_space<vmem>>, vector<16x64xf32>
    tpu.vector_store %arg6[%c0_10, %c0_11], %16 {strides = array<i32>} : memref<16x64xf32, #tpu.memory_space<vmem>>, vector<16x64xf32>,
    return
  }
  func.func @transform_0(%arg0: i32) -> (i32, i32) {
    %c0_i32 = arith.constant 0 : i32
    %c0_i32_0 = arith.constant 0 : i32
    return %arg0, %c0_i32 : i32, i32
  }
  func.func @transform_1(%arg0: i32) -> (i32, i32) {
    %c0_i32 = arith.constant 0 : i32
    %c0_i32_0 = arith.constant 0 : i32
    return %arg0, %c0_i32 : i32, i32
  }
  func.func @transform_2(%arg0: i32) -> (i32, i32) {
    %c0_i32 = arith.constant 0 : i32
    %c0_i32_0 = arith.constant 0 : i32
    %c0_i32_1 = arith.constant 0 : i32
    return %c0_i32, %c0_i32_0 : i32, i32
  }
  func.func @transform_3(%arg0: i32) -> (i32, i32) {
    %c0_i32 = arith.constant 0 : i32
    %c0_i32_0 = arith.constant 0 : i32
    return %arg0, %c0_i32 : i32, i32
  }
  func.func @transform_4(%arg0: i32) -> (i32, i32) {
    %c0_i32 = arith.constant 0 : i32
    %c0_i32_0 = arith.constant 0 : i32
    %c0_i32_1 = arith.constant 0 : i32
    return %c0_i32, %c0_i32_0 : i32, i32
  }
  func.func @transform_5(%arg0: i32) -> (i32, i32) {
    %c0_i32 = arith.constant 0 : i32
    %c0_i32_0 = arith.constant 0 : i32
    return %arg0, %c0_i32 : i32, i32
  }
}

</mosaic_0001>

<llo_original>
// kernel: tpu_custom_call.1
$region0: #{tpu_custom_call.1}
  #allocation0 [shape = 'u32[]', space=smem, size = 0x4, offset = 0x4, fixed_abs, tag = 'smem constant byte address 0x4 - core index']
  #allocation1 [shape = 'u32[144,128]{1,0:T(1,128)}', space=vmem, size = 0x12000, scoped, tag = 'internal scratch']
  %s0 = inlined_call_operand.vmem [shape: f32[16,383], index: 0, kind: input, shape index: {}]
  %s1 = inlined_call_operand.vmem [shape: s8[16,383], index: 1, kind: input, shape index: {}]
  %s2 = inlined_call_operand.vmem [shape: bf16[383,64], index: 2, kind: input, shape index: {}]
  %s3 = inlined_call_operand.vmem [shape: f32[16,1], index: 3, kind: input, shape index: {}]
  %s4 = inlined_call_operand.vmem [shape: f32[2,64], index: 4, kind: input, shape index: {}]
  %s5 = inlined_call_operand.hbm [shape: f32[16,64], index: 5, kind: output, shape index: {}]
  %s6 = sld [smem:[#allocation0]]
  $region30: #{tpu_custom_call.1} parent=0
    _
  %s8 = ssub.s32 1, %s6
  %s9 = scalar_select 0, %s8, %s6
  $region1: #{tpu_custom_call.1} parent=0
    #allocation2 [shape = 'u8[8192]{0}', space=vmem, size = 0x2000, scoped, tag = 'output window, operand 0, single buffered']
    #allocation3 [shape = 's32[1]{0}', space=sflag, size = 0x4, scoped, tag = 'scoped memory for tpu_custom_call.1']
    %10 = vsyncpa [#allocation3], 0
    // Predicated region
    $region2: #{tpu_custom_call.1} parent=1 // pred_check
      _
    $region3: #{tpu_custom_call.1} parent=1 // pred_check_branch
      %12 = sbr.rel (0) target = $region5
    $region4: #{tpu_custom_call.1} parent=1 // pred_region
      _
    $region5: #{tpu_custom_call.1} parent=1 // pred_fallthru
      _
    // Predicated region
    $region6: #{tpu_custom_call.1} parent=1 // pred_check
      _
    $region7: #{tpu_custom_call.1} parent=1 // pred_check_branch
      %14 = sbr.rel (0) target = $region9
    $region8: #{tpu_custom_call.1} parent=1 // pred_region
      _
    $region9: #{tpu_custom_call.1} parent=1 // pred_fallthru
      _
    // Predicated region
    $region10: #{tpu_custom_call.1} parent=1 // pred_check
      _
    $region11: #{tpu_custom_call.1} parent=1 // pred_check_branch
      %16 = sbr.rel (0) target = $region13
    $region12: #{tpu_custom_call.1} parent=1 // pred_region
      _
    $region13: #{tpu_custom_call.1} parent=1 // pred_fallthru
      _
    // Predicated region
    $region14: #{tpu_custom_call.1} parent=1 // pred_check
      _
    $region15: #{tpu_custom_call.1} parent=1 // pred_check_branch
      %18 = sbr.rel (0) target = $region17
    $region16: #{tpu_custom_call.1} parent=1 // pred_region
      _
    $region17: #{tpu_custom_call.1} parent=1 // pred_fallthru
      _
    // Predicated region
    $region18: #{tpu_custom_call.1} parent=1 // pred_check
      _
    $region19: #{tpu_custom_call.1} parent=1 // pred_check_branch
      %20 = sbr.rel (0) target = $region21
    $region20: #{tpu_custom_call.1} parent=1 // pred_region
      _
    $region21: #{tpu_custom_call.1} parent=1 // pred_fallthru
      _
    %v22 = vld [vmem:[%s0] sm:$0xff]
    %v23 = vld [vmem:[%s0 + $0x8] sm:$0xff]
    %v24 = vld [vmem:[%s0 + $0x10] sm:$0xff]
    %v25 = vld [vmem:[%s0 + $0x18] sm:$0xff]
    %v26 = vld [vmem:[%s0 + $0x20] sm:$0xff]
    %v27 = vld [vmem:[%s0 + $0x28] sm:$0xff]
    %v28 = vld [vmem:[%s1] sm:$0x3f]
    %v29 = vld [vmem:[%s1 + $0x6] sm:$0x3f]
    %v30 = vunpack.c.0.s8 %v28
    %v31 = vunpack.c.1.s8 %v28
    %v32 = vunpack.c.2.s8 %v28
    %v33 = vunpack.c.0.s8 %v29
    %v34 = vunpack.c.1.s8 %v29
    %v35 = vunpack.c.2.s8 %v29
    %v36 = vcvt.s32.f32 %v30
    %v37 = vcvt.s32.f32 %v31
    %v38 = vcvt.s32.f32 %v32
    %v39 = vcvt.s32.f32 %v33
    %v40 = vcvt.s32.f32 %v34
    %v41 = vcvt.s32.f32 %v35
    %v42 = vmul.f32 %v22, %v36
    %v43 = vmul.f32 %v23, %v37
    %v44 = vmul.f32 %v24, %v38
    %v45 = vmul.f32 %v25, %v39
    %v46 = vmul.f32 %v26, %v40
    %v47 = vmul.f32 %v27, %v41
    %v48 = vld [vmem:[%s2] sm:$0xf]
    %v49 = vld [vmem:[%s2 + $0x4] sm:$0xf]
    %v50 = vld [vmem:[%s2 + $0x8] sm:$0xf]
    %v51 = vld [vmem:[%s2 + $0xc] sm:$0xf]
    %v52 = vld [vmem:[%s2 + $0x10] sm:$0xf]
    %v53 = vld [vmem:[%s2 + $0x14] sm:$0xf]
    %v54 = vld [vmem:[%s2 + $0x18] sm:$0xf]
    %v55 = vld [vmem:[%s2 + $0x1c] sm:$0xf]
    %v56 = vld [vmem:[%s2 + $0x20] sm:$0xf]
    %v57 = vld [vmem:[%s2 + $0x24] sm:$0xf]
    %v58 = vld [vmem:[%s2 + $0x28] sm:$0xf]
    %v59 = vld [vmem:[%s2 + $0x2c] sm:$0xf]
    %v60 = vld [vmem:[%s2 + $0x30] sm:$0xf]
    %v61 = vld [vmem:[%s2 + $0x34] sm:$0xf]
    %v62 = vld [vmem:[%s2 + $0x38] sm:$0xf]
    %v63 = vld [vmem:[%s2 + $0x3c] sm:$0xf]
    %v64 = vld [vmem:[%s2 + $0x40] sm:$0xf]
    %v65 = vld [vmem:[%s2 + $0x44] sm:$0xf]
    %v66 = vld [vmem:[%s2 + $0x48] sm:$0xf]
    %v67 = vld [vmem:[%s2 + $0x4c] sm:$0xf]
    %v68 = vld [vmem:[%s2 + $0x50] sm:$0xf]
    %v69 = vld [vmem:[%s2 + $0x54] sm:$0xf]
    %v70 = vld [vmem:[%s2 + $0x58] sm:$0xf]
    %v71 = vld [vmem:[%s2 + $0x5c] sm:$0xf]
    %v72 = vld [vmem:[%s2 + $0x60] sm:$0xf]
    %v73 = vld [vmem:[%s2 + $0x64] sm:$0xf]
    %v74 = vld [vmem:[%s2 + $0x68] sm:$0xf]
    %v75 = vld [vmem:[%s2 + $0x6c] sm:$0xf]
    %v76 = vld [vmem:[%s2 + $0x70] sm:$0xf]
    %v77 = vld [vmem:[%s2 + $0x74] sm:$0xf]
    %v78 = vld [vmem:[%s2 + $0x78] sm:$0xf]
    %v79 = vld [vmem:[%s2 + $0x7c] sm:$0xf]
    %v80 = vld [vmem:[%s2 + $0x80] sm:$0xf]
    %v81 = vld [vmem:[%s2 + $0x84] sm:$0xf]
    %v82 = vld [vmem:[%s2 + $0x88] sm:$0xf]
    %v83 = vld [vmem:[%s2 + $0x8c] sm:$0xf]
    %v84 = vld [vmem:[%s2 + $0x90] sm:$0xf]
    %v85 = vld [vmem:[%s2 + $0x94] sm:$0xf]
    %v86 = vld [vmem:[%s2 + $0x98] sm:$0xf]
    %v87 = vld [vmem:[%s2 + $0x9c] sm:$0xf]
    %v88 = vld [vmem:[%s2 + $0xa0] sm:$0xf]
    %v89 = vld [vmem:[%s2 + $0xa4] sm:$0xf]
    %v90 = vld [vmem:[%s2 + $0xa8] sm:$0xf]
    %v91 = vld [vmem:[%s2 + $0xac] sm:$0xf]
    %v92 = vld [vmem:[%s2 + $0xb0] sm:$0xf]
    %v93 = vld [vmem:[%s2 + $0xb4] sm:$0xf]
    %v94 = vld [vmem:[%s2 + $0xb8] sm:$0xf]
    %v95 = vld [vmem:[%s2 + $0xbc] sm:$0xf]
    %v96 = vpack.c.bf16 %v45, %v42
    %v97 = vpack.c.bf16 %v46, %v43
    %v98 = vpack.c.bf16 %v47, %v44
    %v99 = vld [vmem:[%s3] sm:$0xff]
    %v100 = vld [vmem:[%s3 + $0x8] sm:$0xff]
    %v101 = vld [vmem:[%s4] sm:$0x1]
    %103 = vset.pattern.permute.xlu0 0
    %104 = vperm.xlu0 %103, %v99
    %v105 = vpop.permute.xlu0 %104
    %108 = vset.pattern.permute.xlu0 0
    %109 = vperm.xlu0 %108, %v100
    %v110 = vpop.permute.xlu0 %109
    %v112 = vlaneseq
    %v113 = vshrl.u32 %v112, 7
    %v114 = vsub.s32 0, %v113
    %v115 = vrot.slane %v101, %v114
    %v116 = vmul.f32 %v105, %v115
    %v117 = vmul.f32 %v110, %v115
    %v118 = vld [vmem:[%s4 + $0x1] sm:$0x1]
    %v119 = vlaneseq
    %v120 = vshrl.u32 %v119, 7
    %v121 = vsub.s32 0, %v120
    %v122 = vrot.slane %v118, %v121
    %v123 = vadd.f32 %v116, %v122
    %v124 = vadd.f32 %v117, %v122
    %v125 = vand.u32 2147483647, %v123
    %vm126 = vcmp.le.f32.partialorder %v125, 0.7853982
    %vm127 = vcmp.lt.s32.totalorder %v123, 0
    %v128 = vand.u32 %v123, 2139095040
    %v129 = vshrl.u32 %v128, 23
    %v130 = vsub.s32 %v129, 127
    %v131 = vand.u32 2147483647, %v123
    %v132 = vand.u32 %v131, 8388607
    %v133 = vor.u32 %v132, 8388608
    %v134 = vsub.s32 0, %v133
    %v135 = vadd.s32 %v130, 1
    %vm136 = vcmp.gt.s32.totalorder %v135, 0
    %v137 = vsel %vm136, %v135, 0
    %v138 = vshrl.u32 %v137, 5
    %v139 = vand.u32 %v137, 31
    %v140 = vsub.s32 32, %v139
    %v141 = vshrl.u32 683565275, %v140
    %v142 = vshll.u32 683565275, %v139
    %v143 = vshrl.u32 2475754826, %v140
    %v144 = vor.u32 %v142, %v143
    %v145 = vshll.u32 2475754826, %v139
    %v146 = vshrl.u32 2131351028, %v140
    %v147 = vor.u32 %v145, %v146
    %v148 = vshll.u32 2131351028, %v139
    %v149 = vshrl.u32 2102212464, %v140
    %v150 = vor.u32 %v148, %v149
    %v151 = vshll.u32 2102212464, %v139
    %v152 = vshrl.u32 920167782, %v140
    %v153 = vor.u32 %v151, %v152
    %v154 = vshll.u32 920167782, %v139
    %v155 = vshrl.u32 1326507024, %v140
    %v156 = vor.u32 %v154, %v155
    %vm157 = vcmp.lt.s32.totalorder %v138, 1
    %vm158 = vcmp.lt.s32.totalorder %v138, 2
    %vm159 = vcmp.lt.s32.totalorder %v138, 3
    %vm160 = vcmp.lt.s32.totalorder %v138, 4
    %v161 = vsel %vm157, %v141, %v144
    %v162 = vsel %vm160, %v150, 2102212464
    %v163 = vsel %vm159, %v147, %v162
    %v164 = vsel %vm158, %v161, %v163
    %v165 = vsel %vm157, %v144, %v147
    %v166 = vsel %vm160, %v153, 920167782
    %v167 = vsel %vm159, %v150, %v166
    %v168 = vsel %vm158, %v165, %v167
    %v169 = vsel %vm157, %v147, %v150
    %v170 = vsel %vm160, %v156, 1326507024
    %v171 = vsel %vm159, %v153, %v170
    %v172 = vsel %vm158, %v169, %v171
    %v173 = vshll.u32 %v133, 8
    %v174 = vmul.u32.u64.compose %v173, %v172
    %v175 = vextract.low.u32 %v174
    %v176 = vextract.high.u32 %v174
    %v177 = vmul.u32.u64.compose %v173, %v168
    %v178 = vextract.low.u32 %v177
    %v179 = vextract.high.u32 %v177
    %v180 = vmul.u32 %v173, %v164
    %v181 = vadd.s32 %v176, %v178
    %vm182 = vc.u32 %v176, %v178
    %v183 = vadd.s32 %v179, 1
    %v184 = vsel %vm182, %v183, %v179
    %v185 = vadd.s32 %v180, %v184
    %v186 = vadd.s32 %v185, 536870912
    %v187 = vshrl.u32 %v186, 30
    %v188 = vshll.u32 %v187, 30
    %v189 = vsub.s32 %v185, %v188
    %vm190 = vcmp.lt.s32.totalorder %v189, 0
    %v191 = vsub.s32 0, %v189
    %v192 = vsel %vm190, %v191, %v189
    %v193 = vclz %v192
    %v194 = vsub.s32 %v193, 2
    %vm195 = vcmp.gt.s32.totalorder 0, %v194
    %v196 = vsel %vm195, 0, %v194
    %v197 = vsub.s32 32, %v196
    %v198 = vshll.u32 %v189, %v196
    %v199 = vshrl.u32 %v181, %v197
    %v200 = vor.u32 %v198, %v199
    %v201 = vsub.s32 4294967266, %v196
    %v202 = vadd.s32 %v201, 127
    %v203 = vshll.u32 %v202, 23
    %v204 = vor.u32 4788187, %v203
    %v205 = vand.u32 2147483647, %v204
    %v207 = vcvt.s32.f32 %v200
    %v208 = vmul.f32 %v207, %v205
    %v209 = vxor.u32 %v208, 2147483648
    %v210 = vsel %vm127, %v209, %v208
    %v211 = vsub.s32 4, %v187
    %v212 = vsel %vm127, %v211, %v187
    %v213 = vsel %vm126, %v123, %v210
    %v214 = vsel %vm126, 0, %v212
    %v215 = vcosq.f32.pop %v213
    %v216 = vsinq.f32.pop %v213
    %vm217 = vweird.f32 %v123
    %v218 = vadd.s32 %v214, 3
    %v219 = vand.u32 %v218, 3
    %vm220 = vcmp.lt.s32.totalorder %v219, 2
    %vm221 = vcmp.eq.s32.totalorder %v219, 0
    %v222 = vxor.u32 %v216, 2147483648
    %v223 = vsel %vm221, %v215, %v222
    %vm224 = vcmp.eq.s32.totalorder %v219, 2
    %v225 = vxor.u32 %v215, 2147483648
    %v226 = vsel %vm224, %v225, %v216
    %v227 = vsel %vm220, %v223, %v226
    %v228 = vsel %vm217, nan, %v227
    %v229 = vand.u32 2147483647, %v124
    %vm230 = vcmp.le.f32.partialorder %v229, 0.7853982
    %vm231 = vcmp.lt.s32.totalorder %v124, 0
    %v232 = vand.u32 %v124, 2139095040
    %v233 = vshrl.u32 %v232, 23
    %v234 = vsub.s32 %v233, 127
    %v235 = vand.u32 2147483647, %v124
    %v236 = vand.u32 %v235, 8388607
    %v237 = vor.u32 %v236, 8388608
    %v238 = vsub.s32 0, %v237
    %v239 = vadd.s32 %v234, 1
    %vm240 = vcmp.gt.s32.totalorder %v239, 0
    %v241 = vsel %vm240, %v239, 0
    %v242 = vshrl.u32 %v241, 5
    %v243 = vand.u32 %v241, 31
    %v244 = vsub.s32 32, %v243
    %v245 = vshrl.u32 683565275, %v244
    %v246 = vshll.u32 683565275, %v243
    %v247 = vshrl.u32 2475754826, %v244
    %v248 = vor.u32 %v246, %v247
    %v249 = vshll.u32 2475754826, %v243
    %v250 = vshrl.u32 2131351028, %v244
    %v251 = vor.u32 %v249, %v250
    %v252 = vshll.u32 2131351028, %v243
    %v253 = vshrl.u32 2102212464, %v244
    %v254 = vor.u32 %v252, %v253
    %v255 = vshll.u32 2102212464, %v243
    %v256 = vshrl.u32 920167782, %v244
    %v257 = vor.u32 %v255, %v256
    %v258 = vshll.u32 920167782, %v243
    %v259 = vshrl.u32 1326507024, %v244
    %v260 = vor.u32 %v258, %v259
    %vm261 = vcmp.lt.s32.totalorder %v242, 1
    %vm262 = vcmp.lt.s32.totalorder %v242, 2
    %vm263 = vcmp.lt.s32.totalorder %v242, 3
    %vm264 = vcmp.lt.s32.totalorder %v242, 4
    %v265 = vsel %vm261, %v245, %v248
    %v266 = vsel %vm264, %v254, 2102212464
    %v267 = vsel %vm263, %v251, %v266
    %v268 = vsel %vm262, %v265, %v267
    %v269 = vsel %vm261, %v248, %v251
    %v270 = vsel %vm264, %v257, 920167782
    %v271 = vsel %vm263, %v254, %v270
    %v272 = vsel %vm262, %v269, %v271
    %v273 = vsel %vm261, %v251, %v254
    %v274 = vsel %vm264, %v260, 1326507024
    %v275 = vsel %vm263, %v257, %v274
    %v276 = vsel %vm262, %v273, %v275
    %v277 = vshll.u32 %v237, 8
    %v278 = vmul.u32.u64.compose %v277, %v276
    %v279 = vextract.low.u32 %v278
    %v280 = vextract.high.u32 %v278
    %v281 = vmul.u32.u64.compose %v277, %v272
    %v282 = vextract.low.u32 %v281
    %v283 = vextract.high.u32 %v281
    %v284 = vmul.u32 %v277, %v268
    %v285 = vadd.s32 %v280, %v282
    %vm286 = vc.u32 %v280, %v282
    %v287 = vadd.s32 %v283, 1
    %v288 = vsel %vm286, %v287, %v283
    %v289 = vadd.s32 %v284, %v288
    %v290 = vadd.s32 %v289, 536870912
    %v291 = vshrl.u32 %v290, 30
    %v292 = vshll.u32 %v291, 30
    %v293 = vsub.s32 %v289, %v292
    %vm294 = vcmp.lt.s32.totalorder %v293, 0
    %v295 = vsub.s32 0, %v293
    %v296 = vsel %vm294, %v295, %v293
    %v297 = vclz %v296
    %v298 = vsub.s32 %v297, 2
    %vm299 = vcmp.gt.s32.totalorder 0, %v298
    %v300 = vsel %vm299, 0, %v298
    %v301 = vsub.s32 32, %v300
    %v302 = vshll.u32 %v293, %v300
    %v303 = vshrl.u32 %v285, %v301
    %v304 = vor.u32 %v302, %v303
    %v305 = vsub.s32 4294967266, %v300
    %v306 = vadd.s32 %v305, 127
    %v307 = vshll.u32 %v306, 23
    %v308 = vor.u32 4788187, %v307
    %v309 = vand.u32 2147483647, %v308
    %v311 = vcvt.s32.f32 %v304
    %v312 = vmul.f32 %v311, %v309
    %v313 = vxor.u32 %v312, 2147483648
    %v314 = vsel %vm231, %v313, %v312
    %v315 = vsub.s32 4, %v291
    %v316 = vsel %vm231, %v315, %v291
    %v317 = vsel %vm230, %v124, %v314
    %v318 = vsel %vm230, 0, %v316
    %v319 = vcosq.f32.pop %v317
    %v320 = vsinq.f32.pop %v317
    %vm321 = vweird.f32 %v124
    %v322 = vadd.s32 %v318, 3
    %v323 = vand.u32 %v322, 3
    %vm324 = vcmp.lt.s32.totalorder %v323, 2
    %vm325 = vcmp.eq.s32.totalorder %v323, 0
    %v326 = vxor.u32 %v320, 2147483648
    %v327 = vsel %vm325, %v319, %v326
    %vm328 = vcmp.eq.s32.totalorder %v323, 2
    %v329 = vxor.u32 %v319, 2147483648
    %v330 = vsel %vm328, %v329, %v320
    %v331 = vsel %vm324, %v327, %v330
    %v332 = vsel %vm321, nan, %v331
    %v381 = vunpack.c.l.b16 %v48
    %v382 = vunpack.c.l.b16 %v49
    %v383 = vunpack.c.l.b16 %v50
    %v384 = vunpack.c.l.b16 %v51
    %v385 = vunpack.c.l.b16 %v52
    %v386 = vunpack.c.l.b16 %v53
    %v387 = vunpack.c.l.b16 %v54
    %v388 = vunpack.c.l.b16 %v55
    %v389 = vunpack.c.l.b16 %v56
    %v390 = vunpack.c.l.b16 %v57
    %v391 = vunpack.c.l.b16 %v58
    %v392 = vunpack.c.l.b16 %v59
    %v393 = vunpack.c.l.b16 %v60
    %v394 = vunpack.c.l.b16 %v61
    %v395 = vunpack.c.l.b16 %v62
    %v396 = vunpack.c.l.b16 %v63
    %v397 = vunpack.c.l.b16 %v64
    %v398 = vunpack.c.l.b16 %v65
    %v399 = vunpack.c.l.b16 %v66
    %v400 = vunpack.c.l.b16 %v67
    %v401 = vunpack.c.l.b16 %v68
    %v402 = vunpack.c.l.b16 %v69
    %v403 = vunpack.c.l.b16 %v70
    %v404 = vunpack.c.l.b16 %v71
    %v405 = vunpack.c.l.b16 %v72
    %v406 = vunpack.c.l.b16 %v73
    %v407 = vunpack.c.l.b16 %v74
    %v408 = vunpack.c.l.b16 %v75
    %v409 = vunpack.c.l.b16 %v76
    %v410 = vunpack.c.l.b16 %v77
    %v411 = vunpack.c.l.b16 %v78
    %v412 = vunpack.c.l.b16 %v79
    %v413 = vunpack.c.l.b16 %v80
    %v414 = vunpack.c.l.b16 %v81
    %v415 = vunpack.c.l.b16 %v82
    %v416 = vunpack.c.l.b16 %v83
    %v417 = vunpack.c.l.b16 %v84
    %v418 = vunpack.c.l.b16 %v85
    %v419 = vunpack.c.l.b16 %v86
    %v420 = vunpack.c.l.b16 %v87
    %v421 = vunpack.c.l.b16 %v88
    %v422 = vunpack.c.l.b16 %v89
    %v423 = vunpack.c.l.b16 %v90
    %v424 = vunpack.c.l.b16 %v91
    %v425 = vunpack.c.l.b16 %v92
    %v426 = vunpack.c.l.b16 %v93
    %v427 = vunpack.c.l.b16 %v94
    %v428 = vunpack.c.l.b16 %v95
    %v429 = vpack.c.b16 %v382, %v381
    %v430 = vpack.c.b16 %v384, %v383
    %v431 = vpack.c.b16 %v386, %v385
    %v432 = vpack.c.b16 %v388, %v387
    %v433 = vpack.c.b16 %v390, %v389
    %v434 = vpack.c.b16 %v392, %v391
    %v435 = vpack.c.b16 %v394, %v393
    %v436 = vpack.c.b16 %v396, %v395
    %v437 = vpack.c.b16 %v398, %v397
    %v438 = vpack.c.b16 %v400, %v399
    %v439 = vpack.c.b16 %v402, %v401
    %v440 = vpack.c.b16 %v404, %v403
    %v441 = vpack.c.b16 %v406, %v405
    %v442 = vpack.c.b16 %v408, %v407
    %v443 = vpack.c.b16 %v410, %v409
    %v444 = vpack.c.b16 %v412, %v411
    %v445 = vpack.c.b16 %v414, %v413
    %v446 = vpack.c.b16 %v416, %v415
    %v447 = vpack.c.b16 %v418, %v417
    %v448 = vpack.c.b16 %v420, %v419
    %v449 = vpack.c.b16 %v422, %v421
    %v450 = vpack.c.b16 %v424, %v423
    %v451 = vpack.c.b16 %v426, %v425
    %v452 = vpack.c.b16 %v428, %v427
    %vm476 = vcmask 1039360
    %v478 = vsel %vm476, %v98, 0
    %vm480 = vcmask 1046528
    %vm481 = vcmask 1047552
    %v482 = vsel %vm480, 4294967295, 65535
    %v483 = vsel %vm481, %v482, 0
    %v485 = vand.u32 %v452, %v483
    %487 = vmatprep.subr.bf16.mxu0 0
    %488 = vmatpush1.bf16.msra.mxu0 %v429
    %489 = vmatprep.subr.bf16.mxu0 0
    %490 = vmatpush1.bf16.msra.mxu0 %v430
    %491 = vmatprep.subr.bf16.mxu0 0
    %492 = vmatpush1.bf16.msra.mxu0 %v431
    %493 = vmatprep.subr.bf16.mxu0 0
    %494 = vmatpush1.bf16.msra.mxu0 %v432
    %495 = vmatprep.subr.bf16.mxu0 0
    %496 = vmatpush1.bf16.msra.mxu0 %v433
    %497 = vmatprep.subr.bf16.mxu0 0
    %498 = vmatpush1.bf16.msra.mxu0 %v434
    %499 = vmatprep.subr.bf16.mxu0 0
    %500 = vmatpush1.bf16.msra.mxu0 %v435
    %501 = vmatprep.subr.bf16.mxu0 0
    %502 = vmatpush1.bf16.msra.mxu0 %v436
    %503 = vmatprep.subr.bf16.mxu0 0
    %504 = vmatpush1.bf16.msra.mxu0 %v437
    %505 = vmatprep.subr.bf16.mxu0 0
    %506 = vmatpush1.bf16.msra.mxu0 %v438
    %507 = vmatprep.subr.bf16.mxu0 0
    %508 = vmatpush1.bf16.msra.mxu0 %v439
    %509 = vmatprep.subr.bf16.mxu0 0
    %510 = vmatpush1.bf16.msra.mxu0 %v440
    %511 = vmatprep.subr.bf16.mxu0 0
    %512 = vmatpush1.bf16.msra.mxu0 %v441
    %513 = vmatprep.subr.bf16.mxu0 0
    %514 = vmatpush1.bf16.msra.mxu0 %v442
    %515 = vmatprep.subr.bf16.mxu0 0
    %516 = vmatpush1.bf16.msra.mxu0 %v443
    %517 = vmatprep.subr.bf16.mxu0 0
    %518 = vmatpush1.bf16.msra.mxu0 %v444
    %519 = vmatprep.mubr.bf16.mxu0 %v97
    %520 = vmatmul.mubr.bf16.gmra.mrb[0].mxu0 %v96
    %v521 = vpop.f32.mrb[0].mxu0
    %v522 = vadd.f32 %v228, %v521
    %v523 = vpop.f32.mrb[0].mxu0
    %v524 = vpop.f32.mrb[0].mxu0
    %v525 = vadd.f32 %v332, %v524
    %v526 = vpop.f32.mrb[0].mxu0
    %527 = vdwg.mxu0
    %528 = vmatprep.subr.bf16.mxu0 0
    %529 = vmatpush1.bf16.msra.mxu0 %v445
    %530 = vmatprep.subr.bf16.mxu0 0
    %531 = vmatpush1.bf16.msra.mxu0 %v446
    %532 = vmatprep.subr.bf16.mxu0 0
    %533 = vmatpush1.bf16.msra.mxu0 %v447
    %534 = vmatprep.subr.bf16.mxu0 0
    %535 = vmatpush1.bf16.msra.mxu0 %v448
    %536 = vmatprep.subr.bf16.mxu0 0
    %537 = vmatpush1.bf16.msra.mxu0 %v449
    %538 = vmatprep.subr.bf16.mxu0 0
    %539 = vmatpush1.bf16.msra.mxu0 %v450
    %540 = vmatprep.subr.bf16.mxu0 0
    %541 = vmatpush1.bf16.msra.mxu0 %v451
    %542 = vmatprep.subr.bf16.mxu0 0
    %543 = vmatpush1.bf16.msra.mxu0 %v485
    %544 = vmatprep.subr.bf16.mxu0 0
    %545 = vmatpush1.bf16.msra.mxu0 0
    %546 = vmatprep.subr.bf16.mxu0 0
    %547 = vmatpush1.bf16.msra.mxu0 0
    %548 = vmatprep.subr.bf16.mxu0 0
    %549 = vmatpush1.bf16.msra.mxu0 0
    %550 = vmatprep.subr.bf16.mxu0 0
    %551 = vmatpush1.bf16.msra.mxu0 0
    %552 = vmatprep.subr.bf16.mxu0 0
    %553 = vmatpush1.bf16.msra.mxu0 0
    %554 = vmatprep.subr.bf16.mxu0 0
    %555 = vmatpush1.bf16.msra.mxu0 0
    %556 = vmatprep.subr.bf16.mxu0 0
    %557 = vmatpush1.bf16.msra.mxu0 0
    %558 = vmatprep.subr.bf16.mxu0 0
    %559 = vmatpush1.bf16.msra.mxu0 0
    %560 = vmatprep.mubr.bf16.mxu0 0
    %561 = vmatmul.mubr.bf16.gmra.mrb[0].mxu0 %v478
    %v562 = vpop.f32.mrb[0].mxu0
    %v563 = vadd.f32 %v522, %v562
    %v564 = vpop.f32.mrb[0].mxu0
    %v565 = vpop.f32.mrb[0].mxu0
    %v566 = vadd.f32 %v525, %v565
    %v567 = vpop.f32.mrb[0].mxu0
    %568 = vdwg.mxu0
    %vm569 = vcmask 523264
    %570 = vst.msk [vmem:[#allocation2] sm:$0xff] %vm569, %v563
    %571 = vst.msk [vmem:[#allocation2 + $0x8] sm:$0xff] %vm569, %v566
    // Predicated region
    $region22: #{tpu_custom_call.1} parent=1 // pred_check
      _
    $region23: #{tpu_custom_call.1} parent=1 // pred_check_branch
      %573 = sbr.rel (0) target = $region25
    $region24: #{tpu_custom_call.1} parent=1 // pred_region
      %s575 = ssub.s32 256, 256
      %576 = vsyncadd [#allocation3], %s575
      %s577 = sshll.u32 [#allocation2], 4
      %s578 = int_to_ptr.vmem [resolvable:$true] %s577
      %583 = dma.vmem_to_hbm [thread:$0]  %s578, 256, %s5, [#allocation3], 128, 128, 8
    $region25: #{tpu_custom_call.1} parent=1 // pred_fallthru
      _
    // Predicated region
    $region26: #{tpu_custom_call.1} parent=1 // pred_check
      _
    $region27: #{tpu_custom_call.1} parent=1 // pred_check_branch
      %585 = sbr.rel (0) target = $region29
    $region28: #{tpu_custom_call.1} parent=1 // pred_region
      %586 = dma.done [#allocation3], 256
    $region29: #{tpu_custom_call.1} parent=1 // pred_fallthru
      _
    %587 = vsyncpa [#allocation3], 1

</llo_original>
